<compile_context>
chip_gen: v7x
topology: tpu7x:2x2x1
jax: 0.10.0
libtpu: 0.0.40
codegen_flags: <defaults>
</compile_context>

<pallas_src>
import functools
import math

import jax
import jax.numpy as jnp
from jax import lax
from jax.experimental import pallas as pl
from jax.experimental.pallas import tpu as pltpu


def _gelu_exact(x):
    # PyTorch nn.GELU() default = exact erf formulation.
    return 0.5 * x * (1.0 + lax.erf(x * (1.0 / math.sqrt(2.0))))


def _round_up(x, m):
    return (x + m - 1) // m * m


def _pad2(a, rows, cols):
    if a.shape[0] == rows and a.shape[1] == cols:
        return a
    return jnp.pad(a, ((0, rows - a.shape[0]), (0, cols - a.shape[1])))


def _choose_tile_m(m, cin_p, cout_p, budget_bytes=8 << 20):
    """Largest power-of-two row tile (<=512) whose streamed blocks fit budget."""
    tm = 512
    while tm > 8 and 4 * 2 * tm * (cin_p + cout_p) > budget_bytes:
        tm //= 2
    tm = min(tm, _round_up(m, 8))
    return max(8, tm)


# --------------------------- fused kernel -----------------------------------
# grid = (2, T): axis 0 = pass (0: matmuls + stats, 1: normalize), axis 1 = M
# tile.  y stays resident in a VMEM scratch slab between the two passes.


def mlp_fused_kernel(x_ref, w1_ref, b1_ref, w2_ref, gamma_ref, beta_ref,
                     o_ref, y_slab, sum_ref, sq_ref, sb_ref,
                     *, m_true, tm, eps, mask_rows):
    p = pl.program_id(0)
    i = pl.program_id(1)
    nt = pl.num_programs(1)
    row0 = pl.multiple_of(i * tm, tm)

    @pl.when(p == 0)
    def _pass0():
        @pl.when(i == 0)
        def _init():
            sum_ref[...] = jnp.zeros_like(sum_ref)
            sq_ref[...] = jnp.zeros_like(sq_ref)

        x = x_ref[...]                                            # (tm, Cin_p)
        h = jnp.dot(x, w1_ref[...], preferred_element_type=jnp.float32)
        h = _gelu_exact(h + b1_ref[...])                          # (tm, H_p)
        y = jnp.dot(h, w2_ref[...], preferred_element_type=jnp.float32)
        y_slab[pl.ds(row0, tm), :] = y                            # resident y

        # Exclude padded rows (>= m_true) from the batch statistics.  When
        # there is no row padding this branch is compiled out entirely.
        if mask_rows:
            rows = row0 + lax.broadcasted_iota(jnp.int32, (tm, 1), 0)
            ym = jnp.where(rows < m_true, y, 0.0)
        else:
            ym = y
        sum_ref[...] += jnp.sum(ym, axis=0, keepdims=True)
        sq_ref[...] += jnp.sum(ym * ym, axis=0, keepdims=True)

        @pl.when(i == nt - 1)
        def _finalize():
            inv_m = 1.0 / float(m_true)
            mean = sum_ref[...] * inv_m
            var = jnp.maximum(sq_ref[...] * inv_m - mean * mean, 0.0)
            scale = gamma_ref[...] * lax.rsqrt(var + eps)
            sb_ref[0:1, :] = scale
            sb_ref[1:2, :] = beta_ref[...] - mean * scale

    @pl.when(p == 1)
    def _pass1():
        y = y_slab[pl.ds(row0, tm), :]
        o_ref[...] = y * sb_ref[0:1, :] + sb_ref[1:2, :]


# --------------------------- unfused fallback -------------------------------


def mlp_stats_kernel(x_ref, w1_ref, b1_ref, w2_ref, y_ref, sum_ref, sq_ref,
                     *, m_true, tm, mask_rows):
    i = pl.program_id(0)

    @pl.when(i == 0)
    def _init():
        sum_ref[...] = jnp.zeros_like(sum_ref)
        sq_ref[...] = jnp.zeros_like(sq_ref)

    x = x_ref[...]
    h = _gelu_exact(jnp.dot(x, w1_ref[...],
                            preferred_element_type=jnp.float32) + b1_ref[...])
    y = jnp.dot(h, w2_ref[...], preferred_element_type=jnp.float32)
    y_ref[...] = y

    if mask_rows:
        rows = i * tm + lax.broadcasted_iota(jnp.int32, (tm, 1), 0)
        ym = jnp.where(rows < m_true, y, 0.0)
    else:
        ym = y
    sum_ref[...] += jnp.sum(ym, axis=0, keepdims=True)
    sq_ref[...] += jnp.sum(ym * ym, axis=0, keepdims=True)


def bn_apply_kernel(y_ref, scale_ref, bias_ref, o_ref):
    o_ref[...] = y_ref[...] * scale_ref[...] + bias_ref[...]


# ------------------------------ wrapper --------------------------------------


def mlp_forward(f, params, *, eps=1e-5, tile_m=None,
                fuse_slab_budget_bytes=16 << 20, force_unfused=False):
    """f: [B, N, C_in] float32 -> [B, N, C_out] float32."""
    assert f.ndim == 3
    B, N, Cin = f.shape
    M = B * N
    w1, b1, w2, gamma, beta = (params["w1"], params["b1"], params["w2"],
                               params["gamma"], params["beta"])
    H = w1.shape[1]
    Cout = w2.shape[1]

    # Lane-dense channel padding (multiples of 128) + sublane-aligned M tile.
    Cin_p = _round_up(Cin, 128)
    H_p = _round_up(H, 128)
    Cout_p = _round_up(Cout, 128)
    tm = tile_m if tile_m is not None else _choose_tile_m(M, Cin_p, Cout_p)
    tm = max(8, _round_up(min(tm, _round_up(M, 8)), 8))
    M_pad = _round_up(M, tm)
    T = M_pad // tm
    mask_rows = (M_pad != M)

    x = _pad2(f.reshape(M, Cin).astype(jnp.float32), M_pad, Cin_p)
    w1p = _pad2(w1.astype(jnp.float32), Cin_p, H_p)
    b1p = _pad2(b1.astype(jnp.float32), 1, H_p)
    w2p = _pad2(w2.astype(jnp.float32), H_p, Cout_p)
    gp = _pad2(gamma.astype(jnp.float32), 1, Cout_p)
    bp = _pad2(beta.astype(jnp.float32), 1, Cout_p)

    fused = (not force_unfused) and (M_pad * Cout_p * 4 <= fuse_slab_budget_bytes)

    # Explicit VMEM limit (raises v5e's 16 MiB default; <= v7x's 64 MiB).
    weight_elems = Cin_p * H_p + H_p + H_p * Cout_p + 2 * Cout_p
    stream_elems = 2 * tm * (Cin_p + Cout_p)          # double-buffered tiles
    slab_elems = (M_pad * Cout_p + 8 * Cout_p) if fused else 8 * Cout_p
    vmem_limit = int(min(
        max(2 * 4 * (weight_elems + stream_elems + slab_elems), 32 << 20),
        64 << 20))

    if fused:
        # x is only needed in pass 0; during pass 1 pin its block to the last
        # pass-0 block so no extra DMA is issued.
        last = T - 1
        out_p = pl.pallas_call(
            functools.partial(mlp_fused_kernel, m_true=M, tm=tm, eps=eps,
                              mask_rows=mask_rows),
            out_shape=jax.ShapeDtypeStruct((M_pad, Cout_p), jnp.float32),
            grid_spec=pltpu.PrefetchScalarGridSpec(
                num_scalar_prefetch=0,
                grid=(2, T),
                in_specs=[
                    pl.BlockSpec((tm, Cin_p),
                                 lambda p, i: ((1 - p) * i + p * last, 0)),
                    pl.BlockSpec((Cin_p, H_p), lambda p, i: (0, 0)),
                    pl.BlockSpec((1, H_p), lambda p, i: (0, 0)),
                    pl.BlockSpec((H_p, Cout_p), lambda p, i: (0, 0)),
                    pl.BlockSpec((1, Cout_p), lambda p, i: (0, 0)),
                    pl.BlockSpec((1, Cout_p), lambda p, i: (0, 0)),
                ],
                # Pass 0 parks the (unwritten) output on block 0; it is fully
                # overwritten at (1, 0) before the first HBM flush.
                out_specs=pl.BlockSpec((tm, Cout_p), lambda p, i: (i * p, 0)),
                scratch_shapes=[
                    pltpu.VMEM((M_pad, Cout_p), jnp.float32),   # y slab
                    pltpu.VMEM((1, Cout_p), jnp.float32),       # sum
                    pltpu.VMEM((1, Cout_p), jnp.float32),       # sumsq
                    pltpu.VMEM((2, Cout_p), jnp.float32),       # scale / bias
                ],
            ),
            compiler_params=pltpu.CompilerParams(
                dimension_semantics=("arbitrary", "arbitrary"),
                vmem_limit_bytes=vmem_limit),
        )(x, w1p, b1p, w2p, gp, bp)
        return out_p[:M, :Cout].reshape(B, N, Cout)

    # ---- unfused fallback: y slab too large to keep resident in VMEM ----
    y, ch_sum, ch_sq = pl.pallas_call(
        functools.partial(mlp_stats_kernel, m_true=M, tm=tm,
                          mask_rows=mask_rows),
        out_shape=(
            jax.ShapeDtypeStruct((M_pad, Cout_p), jnp.float32),
            jax.ShapeDtypeStruct((1, Cout_p), jnp.float32),
            jax.ShapeDtypeStruct((1, Cout_p), jnp.float32),
        ),
        grid_spec=pltpu.PrefetchScalarGridSpec(
            num_scalar_prefetch=0,
            grid=(T,),
            in_specs=[
                pl.BlockSpec((tm, Cin_p), lambda i: (i, 0)),
                pl.BlockSpec((Cin_p, H_p), lambda i: (0, 0)),
                pl.BlockSpec((1, H_p), lambda i: (0, 0)),
                pl.BlockSpec((H_p, Cout_p), lambda i: (0, 0)),
            ],
            out_specs=(
                pl.BlockSpec((tm, Cout_p), lambda i: (i, 0)),
                pl.BlockSpec((1, Cout_p), lambda i: (0, 0)),
                pl.BlockSpec((1, Cout_p), lambda i: (0, 0)),
            ),
        ),
        compiler_params=pltpu.CompilerParams(
            dimension_semantics=("arbitrary",),
            vmem_limit_bytes=vmem_limit),
    )(x, w1p, b1p, w2p)

    # Tiny per-channel epilogue: fold BN into one scale/bias.
    inv_m = 1.0 / float(M)
    mean = ch_sum * inv_m
    var = jnp.maximum(ch_sq * inv_m - mean * mean, 0.0)
    scale = gp * lax.rsqrt(var + eps)
    bias = bp - mean * scale

    out_p = pl.pallas_call(
        bn_apply_kernel,
        out_shape=jax.ShapeDtypeStruct((M_pad, Cout_p), jnp.float32),
        grid_spec=pltpu.PrefetchScalarGridSpec(
            num_scalar_prefetch=0,
            grid=(T,),
            in_specs=[
                pl.BlockSpec((tm, Cout_p), lambda i: (i, 0)),
                pl.BlockSpec((1, Cout_p), lambda i: (0, 0)),
                pl.BlockSpec((1, Cout_p), lambda i: (0, 0)),
            ],
            out_specs=pl.BlockSpec((tm, Cout_p), lambda i: (i, 0)),
        ),
        compiler_params=pltpu.CompilerParams(
            dimension_semantics=("parallel",),
            vmem_limit_bytes=vmem_limit),
        input_output_aliases={0: 0},   # reuse y's HBM buffer for the output
    )(y, scale, bias)

    return out_p[:M, :Cout].reshape(B, N, Cout)


# ------------------------------ params / reference ---------------------------


def init_params(key, in_channels, hidden_channels, output_channels,
                init_weight=0.0):
    """Synthetic params mirroring the PyTorch module shapes (w stored transposed)."""
    k1, k2, k3 = jax.random.split(key, 3)
    lim1 = 1.0 / math.sqrt(in_channels)
    lim2 = 1.0 / math.sqrt(hidden_channels)
    w1 = jax.random.uniform(k1, (in_channels, hidden_channels),
                            jnp.float32, -lim1, lim1)
    b1 = jax.random.uniform(k2, (1, hidden_channels), jnp.float32, -lim1, lim1)
    w2 = jax.random.uniform(k3, (hidden_channels, output_channels),
                            jnp.float32, -lim2, lim2)
    gamma = jnp.full((1, output_channels), init_weight, jnp.float32)
    beta = jnp.zeros((1, output_channels), jnp.float32)
    return dict(w1=w1, b1=b1, w2=w2, gamma=gamma, beta=beta)


def mlp_reference(f, params, eps=1e-5):
    B, N, _ = f.shape
    x = f.reshape(B * N, -1)
    h = _gelu_exact(x @ params["w1"] + params["b1"])
    y = h @ params["w2"]
    mean = jnp.mean(y, axis=0, keepdims=True)
    var = jnp.mean((y - mean) ** 2, axis=0, keepdims=True)  # biased
    o = (y - mean) * lax.rsqrt(var + eps) * params["gamma"] + params["beta"]
    return o.reshape(B, N, -1)


if __name__ == "__main__":
    B, N = 2, 64
    in_channels, hidden_channels, output_channels = 16, 32, 16
    bn_momentum = 0.1  # only affects running stats, not the forward output

    key = jax.random.PRNGKey(0)
    kf, kp = jax.random.split(key)
    f = jax.random.normal(kf, (B, N, in_channels), jnp.float32)
    params = init_params(kp, in_channels, hidden_channels, output_channels,
                         init_weight=0.5)

    ref = mlp_reference(f, params)

    fwd_fused = jax.jit(functools.partial(mlp_forward, force_unfused=False))
    fwd_unfused = jax.jit(functools.partial(mlp_forward, force_unfused=True))

    out_fused = jax.block_until_ready(fwd_fused(f, params))
    out_unfused = jax.block_until_ready(fwd_unfused(f, params))

    assert out_fused.shape == (B, N, output_channels)
    assert jnp.allclose(out_fused, ref, atol=1e-4, rtol=1e-4), (
        float(jnp.max(jnp.abs(out_fused - ref))))
    assert jnp.allclose(out_unfused, ref, atol=1e-4, rtol=1e-4), (
        float(jnp.max(jnp.abs(out_unfused - ref))))
    print("KERNEL_OK")
</pallas_src>

<mosaic_0001>
module attributes {stable_mosaic.version = 11 : i64} {
  func.func @mlp_fused_kernel(%arg0: i32, %arg1: i32, %arg2: memref<128x128xf32, #tpu.memory_space<vmem>>, %arg3: memref<128x128xf32, #tpu.memory_space<vmem>>, %arg4: memref<1x128xf32, #tpu.memory_space<vmem>>, %arg5: memref<128x128xf32, #tpu.memory_space<vmem>>, %arg6: memref<1x128xf32, #tpu.memory_space<vmem>>, %arg7: memref<1x128xf32, #tpu.memory_space<vmem>>, %arg8: memref<128x128xf32, #tpu.memory_space<vmem>>, %arg9: memref<128x128xf32, #tpu.memory_space<vmem>>, %arg10: memref<1x128xf32, #tpu.memory_space<vmem>>, %arg11: memref<1x128xf32, #tpu.memory_space<vmem>>, %arg12: memref<2x128xf32, #tpu.memory_space<vmem>>) attributes {dimension_semantics = [#tpu.dimension_semantics<arbitrary>, #tpu.dimension_semantics<arbitrary>], iteration_bounds = array<i64: 2, 1>, scalar_prefetch = 0 : i64, scratch_operands = 4 : i64, tpu.core_type = #tpu.core_type<tc>, window_params = [{transform_indices = @transform_0, window_bounds = array<i64: 128, 128>}, {pipeline_mode = #tpu.pipeline_mode<synchronous>, transform_indices = @transform_1, window_bounds = array<i64: 128, 128>}, {pipeline_mode = #tpu.pipeline_mode<synchronous>, transform_indices = @transform_2, window_bounds = array<i64: 1, 128>}, {pipeline_mode = #tpu.pipeline_mode<synchronous>, transform_indices = @transform_3, window_bounds = array<i64: 128, 128>}, {pipeline_mode = #tpu.pipeline_mode<synchronous>, transform_indices = @transform_4, window_bounds = array<i64: 1, 128>}, {pipeline_mode = #tpu.pipeline_mode<synchronous>, transform_indices = @transform_5, window_bounds = array<i64: 1, 128>}, {transform_indices = @transform_6, window_bounds = array<i64: 128, 128>}]} {
    %c128_i32 = arith.constant 128 : i32
    %0 = arith.muli %arg1, %c128_i32 : i32
    %1 = tpu.assume_multiple %0, 128 : i32
    %c0_i32 = arith.constant 0 : i32
    %2 = arith.cmpi eq, %arg0, %c0_i32 : i32
    %3 = arith.extui %2 : i1 to i32
    %c0_i32_0 = arith.constant 0 : i32
    %4 = arith.cmpi ne, %3, %c0_i32_0 : i32
    scf.if %4 {
      %c0_i32_2 = arith.constant 0 : i32
      %8 = arith.cmpi eq, %arg1, %c0_i32_2 : i32
      %9 = arith.extui %8 : i1 to i32
      %c0_i32_3 = arith.constant 0 : i32
      %10 = arith.cmpi ne, %9, %c0_i32_3 : i32
      scf.if %10 {
        %cst_28 = arith.constant 0.000000e+00 : f32
        %43 = vector.broadcast %cst_28 : f32 to vector<1x128xf32>
        %c0_29 = arith.constant 0 : index
        %c0_30 = arith.constant 0 : index
        %44 = vector.load %arg10[%c0_29, %c0_30] : memref<1x128xf32, #tpu.memory_space<vmem>>, vector<1x128xf32>
        tpu.vector_store %arg10[%c0_29, %c0_30], %43 {strides = array<i32>} : memref<1x128xf32, #tpu.memory_space<vmem>>, vector<1x128xf32>,
        %cst_31 = arith.constant 0.000000e+00 : f32
        %45 = vector.broadcast %cst_31 : f32 to vector<1x128xf32>
        %c0_32 = arith.constant 0 : index
        %c0_33 = arith.constant 0 : index
        %46 = vector.load %arg11[%c0_32, %c0_33] : memref<1x128xf32, #tpu.memory_space<vmem>>, vector<1x128xf32>
        tpu.vector_store %arg11[%c0_32, %c0_33], %45 {strides = array<i32>} : memref<1x128xf32, #tpu.memory_space<vmem>>, vector<1x128xf32>,
      } else {
      }
      %c0 = arith.constant 0 : index
      %c0_4 = arith.constant 0 : index
      %11 = vector.load %arg2[%c0, %c0_4] : memref<128x128xf32, #tpu.memory_space<vmem>>, vector<128x128xf32>
      %c0_5 = arith.constant 0 : index
      %c0_6 = arith.constant 0 : index
      %12 = vector.load %arg3[%c0_5, %c0_6] : memref<128x128xf32, #tpu.memory_space<vmem>>, vector<128x128xf32>
      %cst = arith.constant dense<0.000000e+00> : vector<128x128xf32>
      %13 = tpu.matmul %11, %12, %cst {dimension_numbers = #tpu.dot_dimension_numbers<[1], [0], [0], [1], [0, 0, 1, 1], [], []>} : vector<128x128xf32>, vector<128x128xf32>, vector<128x128xf32> -> vector<128x128xf32>
      %c0_7 = arith.constant 0 : index
      %c0_8 = arith.constant 0 : index
      %14 = vector.load %arg4[%c0_7, %c0_8] : memref<1x128xf32, #tpu.memory_space<vmem>>, vector<1x128xf32>
      %15 = vector.broadcast %14 : vector<1x128xf32> to vector<128x128xf32>
      %16 = arith.addf %13, %15 : vector<128x128xf32>
      %cst_9 = arith.constant 5.000000e-01 : f32
      %17 = vector.broadcast %cst_9 : f32 to vector<128x128xf32>
      %18 = arith.mulf %17, %16 : vector<128x128xf32>
      %cst_10 = arith.constant 0.707106769 : f32
      %19 = vector.broadcast %cst_10 : f32 to vector<128x128xf32>
      %20 = arith.mulf %16, %19 : vector<128x128xf32>
      %21 = math.erf %20 : vector<128x128xf32>
      %cst_11 = arith.constant 1.000000e+00 : f32
      %22 = vector.broadcast %cst_11 : f32 to vector<128x128xf32>
      %23 = arith.addf %22, %21 : vector<128x128xf32>
      %24 = arith.mulf %18, %23 : vector<128x128xf32>
      %c0_12 = arith.constant 0 : index
      %c0_13 = arith.constant 0 : index
      %25 = vector.load %arg5[%c0_12, %c0_13] : memref<128x128xf32, #tpu.memory_space<vmem>>, vector<128x128xf32>
      %cst_14 = arith.constant dense<0.000000e+00> : vector<128x128xf32>
      %26 = tpu.matmul %24, %25, %cst_14 {dimension_numbers = #tpu.dot_dimension_numbers<[1], [0], [0], [1], [0, 0, 1, 1], [], []>} : vector<128x128xf32>, vector<128x128xf32>, vector<128x128xf32> -> vector<128x128xf32>
      %27 = arith.index_cast %1 : i32 to index
      %c0_15 = arith.constant 0 : index
      %28 = vector.load %arg9[%27, %c0_15] : memref<128x128xf32, #tpu.memory_space<vmem>>, vector<128x128xf32>
      tpu.vector_store %arg9[%27, %c0_15], %26 {strides = array<i32>} : memref<128x128xf32, #tpu.memory_space<vmem>>, vector<128x128xf32>,
      %c0_16 = arith.constant 0 : index
      %c0_17 = arith.constant 0 : index
      %29 = vector.load %arg10[%c0_16, %c0_17] : memref<1x128xf32, #tpu.memory_space<vmem>>, vector<1x128xf32>
      %cst_18 = arith.constant dense<0.000000e+00> : vector<128xf32>
      %30 = vector.multi_reduction <add>, %26, %cst_18 [0] : vector<128x128xf32> to vector<128xf32>
      %31 = vector.shape_cast %30 : vector<128xf32> to vector<1x128xf32>
      %32 = arith.addf %29, %31 : vector<1x128xf32>
      %c0_19 = arith.constant 0 : index
      %c0_20 = arith.constant 0 : index
      %33 = vector.load %arg10[%c0_19, %c0_20] : memref<1x128xf32, #tpu.memory_space<vmem>>, vector<1x128xf32>
      tpu.vector_store %arg10[%c0_19, %c0_20], %32 {strides = array<i32>} : memref<1x128xf32, #tpu.memory_space<vmem>>, vector<1x128xf32>,
      %c0_21 = arith.constant 0 : index
      %c0_22 = arith.constant 0 : index
      %34 = vector.load %arg11[%c0_21, %c0_22] : memref<1x128xf32, #tpu.memory_space<vmem>>, vector<1x128xf32>
      %35 = arith.mulf %26, %26 : vector<128x128xf32>
      %cst_23 = arith.constant dense<0.000000e+00> : vector<128xf32>
      %36 = vector.multi_reduction <add>, %35, %cst_23 [0] : vector<128x128xf32> to vector<128xf32>
      %37 = vector.shape_cast %36 : vector<128xf32> to vector<1x128xf32>
      %38 = arith.addf %34, %37 : vector<1x128xf32>
      %c0_24 = arith.constant 0 : index
      %c0_25 = arith.constant 0 : index
      %39 = vector.load %arg11[%c0_24, %c0_25] : memref<1x128xf32, #tpu.memory_space<vmem>>, vector<1x128xf32>
      tpu.vector_store %arg11[%c0_24, %c0_25], %38 {strides = array<i32>} : memref<1x128xf32, #tpu.memory_space<vmem>>, vector<1x128xf32>,
      %c0_i32_26 = arith.constant 0 : i32
      %40 = arith.cmpi eq, %arg1, %c0_i32_26 : i32
      %41 = arith.extui %40 : i1 to i32
      %c0_i32_27 = arith.constant 0 : i32
      %42 = arith.cmpi ne, %41, %c0_i32_27 : i32
      scf.if %42 {
        %c0_28 = arith.constant 0 : index
        %c0_29 = arith.constant 0 : index
        %43 = vector.load %arg10[%c0_28, %c0_29] : memref<1x128xf32, #tpu.memory_space<vmem>>, vector<1x128xf32>
        %cst_30 = arith.constant 7.812500e-03 : f32
        %44 = vector.broadcast %cst_30 : f32 to vector<1x128xf32>
        %45 = arith.mulf %43, %44 : vector<1x128xf32>
        %c0_31 = arith.constant 0 : index
        %c0_32 = arith.constant 0 : index
        %46 = vector.load %arg11[%c0_31, %c0_32] : memref<1x128xf32, #tpu.memory_space<vmem>>, vector<1x128xf32>
        %cst_33 = arith.constant 7.812500e-03 : f32
        %47 = vector.broadcast %cst_33 : f32 to vector<1x128xf32>
        %48 = arith.mulf %46, %47 : vector<1x128xf32>
        %49 = arith.mulf %45, %45 : vector<1x128xf32>
        %50 = arith.subf %48, %49 : vector<1x128xf32>
        %cst_34 = arith.constant 0.000000e+00 : f32
        %51 = vector.broadcast %cst_34 : f32 to vector<1x128xf32>
        %52 = arith.maximumf %50, %51 : vector<1x128xf32>
        %c0_35 = arith.constant 0 : index
        %c0_36 = arith.constant 0 : index
        %53 = vector.load %arg6[%c0_35, %c0_36] : memref<1x128xf32, #tpu.memory_space<vmem>>, vector<1x128xf32>
        %cst_37 = arith.constant 9.99999974E-6 : f32
        %54 = vector.broadcast %cst_37 : f32 to vector<1x128xf32>
        %55 = arith.addf %52, %54 : vector<1x128xf32>
        %56 = math.rsqrt %55 : vector<1x128xf32>
        %57 = arith.mulf %53, %56 : vector<1x128xf32>
        %c0_38 = arith.constant 0 : index
        %c0_39 = arith.constant 0 : index
        %58 = vector.load %arg12[%c0_38, %c0_39] : memref<2x128xf32, #tpu.memory_space<vmem>>, vector<1x128xf32>
        tpu.vector_store %arg12[%c0_38, %c0_39], %57 {strides = array<i32>} : memref<2x128xf32, #tpu.memory_space<vmem>>, vector<1x128xf32>,
        %c0_40 = arith.constant 0 : index
        %c0_41 = arith.constant 0 : index
        %59 = vector.load %arg7[%c0_40, %c0_41] : memref<1x128xf32, #tpu.memory_space<vmem>>, vector<1x128xf32>
        %60 = arith.mulf %45, %57 : vector<1x128xf32>
        %61 = arith.subf %59, %60 : vector<1x128xf32>
        %c1 = arith.constant 1 : index
        %c0_42 = arith.constant 0 : index
        %62 = vector.load %arg12[%c1, %c0_42] : memref<2x128xf32, #tpu.memory_space<vmem>>, vector<1x128xf32>
        tpu.vector_store %arg12[%c1, %c0_42], %61 {strides = array<i32>} : memref<2x128xf32, #tpu.memory_space<vmem>>, vector<1x128xf32>,
      } else {
      }
    } else {
    }
    %c1_i32 = arith.constant 1 : i32
    %5 = arith.cmpi eq, %arg0, %c1_i32 : i32
    %6 = arith.extui %5 : i1 to i32
    %c0_i32_1 = arith.constant 0 : i32
    %7 = arith.cmpi ne, %6, %c0_i32_1 : i32
    scf.if %7 {
      %8 = arith.index_cast %1 : i32 to index
      %c0 = arith.constant 0 : index
      %9 = vector.load %arg9[%8, %c0] : memref<128x128xf32, #tpu.memory_space<vmem>>, vector<128x128xf32>
      %c0_2 = arith.constant 0 : index
      %c0_3 = arith.constant 0 : index
      %10 = vector.load %arg12[%c0_2, %c0_3] : memref<2x128xf32, #tpu.memory_space<vmem>>, vector<1x128xf32>
      %11 = vector.broadcast %10 : vector<1x128xf32> to vector<128x128xf32>
      %12 = arith.mulf %9, %11 : vector<128x128xf32>
      %c1 = arith.constant 1 : index
      %c0_4 = arith.constant 0 : index
      %13 = vector.load %arg12[%c1, %c0_4] : memref<2x128xf32, #tpu.memory_space<vmem>>, vector<1x128xf32>
      %14 = vector.broadcast %13 : vector<1x128xf32> to vector<128x128xf32>
      %15 = arith.addf %12, %14 : vector<128x128xf32>
      %c0_5 = arith.constant 0 : index
      %c0_6 = arith.constant 0 : index
      %16 = vector.load %arg8[%c0_5, %c0_6] : memref<128x128xf32, #tpu.memory_space<vmem>>, vector<128x128xf32>
      tpu.vector_store %arg8[%c0_5, %c0_6], %15 {strides = array<i32>} : memref<128x128xf32, #tpu.memory_space<vmem>>, vector<128x128xf32>,
    } else {
    }
    return
  }
  func.func @transform_0(%arg0: i32, %arg1: i32) -> (i32, i32) {
    %c1_i32 = arith.constant 1 : i32
    %0 = arith.subi %c1_i32, %arg0 : i32
    %1 = arith.muli %0, %arg1 : i32
    %c0_i32 = arith.constant 0 : i32
    %2 = arith.muli %arg0, %c0_i32 : i32
    %3 = arith.addi %1, %2 : i32
    %c0_i32_0 = arith.constant 0 : i32
    %c0_i32_1 = arith.constant 0 : i32
    return %3, %c0_i32_0 : i32, i32
  }
  func.func @transform_1(%arg0: i32, %arg1: i32) -> (i32, i32) {
    %c0_i32 = arith.constant 0 : i32
    %c0_i32_0 = arith.constant 0 : i32
    %c0_i32_1 = arith.constant 0 : i32
    return %c0_i32, %c0_i32_0 : i32, i32
  }
  func.func @transform_2(%arg0: i32, %arg1: i32) -> (i32, i32) {
    %c0_i32 = arith.constant 0 : i32
    %c0_i32_0 = arith.constant 0 : i32
    %c0_i32_1 = arith.constant 0 : i32
    return %c0_i32, %c0_i32_0 : i32, i32
  }
  func.func @transform_3(%arg0: i32, %arg1: i32) -> (i32, i32) {
    %c0_i32 = arith.constant 0 : i32
    %c0_i32_0 = arith.constant 0 : i32
    %c0_i32_1 = arith.constant 0 : i32
    return %c0_i32, %c0_i32_0 : i32, i32
  }
  func.func @transform_4(%arg0: i32, %arg1: i32) -> (i32, i32) {
    %c0_i32 = arith.constant 0 : i32
    %c0_i32_0 = arith.constant 0 : i32
    %c0_i32_1 = arith.constant 0 : i32
    return %c0_i32, %c0_i32_0 : i32, i32
  }
  func.func @transform_5(%arg0: i32, %arg1: i32) -> (i32, i32) {
    %c0_i32 = arith.constant 0 : i32
    %c0_i32_0 = arith.constant 0 : i32
    %c0_i32_1 = arith.constant 0 : i32
    return %c0_i32, %c0_i32_0 : i32, i32
  }
  func.func @transform_6(%arg0: i32, %arg1: i32) -> (i32, i32) {
    %0 = arith.muli %arg1, %arg0 : i32
    %c0_i32 = arith.constant 0 : i32
    %c0_i32_0 = arith.constant 0 : i32
    return %0, %c0_i32 : i32, i32
  }
}

</mosaic_0001>

<llo_original>
// kernel: mlp_forward.1
$region0: #{mlp_forward.1}
  #allocation0 [shape = 'u32[]', space=smem, size = 0x4, offset = 0x4, fixed_abs, tag = 'smem constant byte address 0x4 - core index']
  #allocation1 [shape = 'u32[144,128]{1,0:T(1,128)}', space=vmem, size = 0x12000, scoped, tag = 'internal scratch']
  #allocation2 [shape = 'f32[128,128]{1,0:T(8,128)}', space=vmem, size = 0x10000, scoped, tag = 'scratch operand']
  #allocation3 [shape = 'f32[1,128]{1,0:T(1,128)}', space=vmem, size = 0x200, scoped, tag = 'scratch operand']
  #allocation4 [shape = 'f32[1,128]{1,0:T(1,128)}', space=vmem, size = 0x200, scoped, tag = 'scratch operand']
  #allocation5 [shape = 'f32[2,128]{1,0:T(2,128)}', space=vmem, size = 0x400, scoped, tag = 'scratch operand']
  %s0 = inlined_call_operand.vmem [shape: f32[128,128], index: 0, kind: input, shape index: {}]
  %s1 = inlined_call_operand.vmem [shape: f32[128,128], index: 1, kind: input, shape index: {}]
  %s2 = inlined_call_operand.vmem [shape: f32[1,128], index: 2, kind: input, shape index: {}]
  %s3 = inlined_call_operand.vmem [shape: f32[128,128], index: 3, kind: input, shape index: {}]
  %s4 = inlined_call_operand.vmem [shape: f32[1,128], index: 4, kind: input, shape index: {}]
  %s5 = inlined_call_operand.vmem [shape: f32[1,128], index: 5, kind: input, shape index: {}]
  %s6 = inlined_call_operand.vmem [shape: f32[128,128], index: 6, kind: output, shape index: {}]
  %s7 = sld [smem:[#allocation0]]
  $region73: #{mlp_forward.1} parent=0
    _
  %s9 = ssub.s32 1, %s7
  %s10 = scalar_select 0, %s9, %s7
  loop: start=0, step=1, limit=4
  $region2: #{mlp_forward.1} parent=0 // loop_pre_header
    _
  $region3: #{mlp_forward.1} parent=0 // loop_header
    %s12 = sphi 0, %s16
    %p13 = scmp.ge.s32.totalorder %s12, 4
    %s19 = sphi 0, %s31
    %s20 = sphi 0, %s27
    %s21 = sphi 0, %s19
    %s22 = sphi 0, %s20
    %s23 = sphi 0, %s21
    %s24 = sphi 0, %s22
    %s38 = sphi 0, %s40
    %s41 = sphi 0, %s38
    %s42 = sphi 0, %s41
    %s58 = sphi 0, %s42
    %s62 = sphi 0, %s62
    %s64 = sphi 0, %s62
    %s65 = sphi 0, %s64
    %s79 = sphi 0, %s65
    %s83 = sphi 0, %s83
    %s85 = sphi 0, %s83
    %s86 = sphi 0, %s85
    %s100 = sphi 0, %s86
    %s104 = sphi 0, %s104
    %s106 = sphi 0, %s104
    %s107 = sphi 0, %s106
    %s121 = sphi 0, %s107
    %s125 = sphi 0, %s125
    %s127 = sphi 0, %s125
    %s128 = sphi 0, %s127
    %s142 = sphi 0, %s128
    %s146 = sphi 0, %s146
    %s148 = sphi 0, %s146
    %s149 = sphi 0, %s148
    %s163 = sphi 0, %s149
    %s171 = sphi 0, %s173
    %s174 = sphi 0, %s171
    %s175 = sphi 0, %s174
    %s191 = sphi 0, %s175
  $region4: #{mlp_forward.1} parent=0 // loop_header_branch
    %15 = sbr.rel (%p13) target = $region8
  $region5: #{mlp_forward.1} parent=0 // loop_body
    %s17 = ssub.s32 %s12, 1
    %s18 = ssub.s32 %s12, 2
    %s25 = sadd.s32 1, %s20
    %p26 = scmp.ge.s32.totalorder %s25, 1
    %s27 = scalar_select %p26, 0, %s25
    %s28 = sadd.s32 1, %s19
    %s29 = scalar_select %p26, %s28, %s19
    %p30 = scmp.ge.s32.totalorder %s29, 2
    %s31 = scalar_select %p30, 0, %s29
    %s32 = ssub.s32 1, %s19
    %s33 = smul.u32 %s32, %s20
    %s34 = ssub.s32 1, %s31
    %s35 = smul.u32 %s34, %s27
    %s36 = ssub.s32 %s33, %s35
    %p37 = scmp.eq.s32.totalorder %s36, 0
    %s39 = sadd.s32 %s38, 1
    %s40 = scalar_select %p37, %s38, %s39
    %p43 = pneg %p37
    %p44 = scmp.eq.s32.totalorder %s12, 1
    %p45 = por %p43, %p44
    %p46 = scmp.ne.s32.totalorder %s38, %s41
    %p47 = scmp.eq.s32.totalorder %s12, 0
    %p48 = por %p46, %p47
    %p49 = scmp.ne.s32.totalorder %s38, %s41
    %p50 = scmp.eq.s32.totalorder %s17, 1
    %p51 = por %p49, %p50
    %p52 = scmp.ne.s32.totalorder %s41, %s42
    %p53 = scmp.eq.s32.totalorder %s17, 0
    %p54 = por %p52, %p53
    %p55 = scmp.ne.s32.totalorder %s41, %s42
    %p56 = scmp.eq.s32.totalorder %s18, 1
    %p57 = por %p55, %p56
    %p59 = scmp.ne.s32.totalorder %s42, %s58
    %p60 = scmp.eq.s32.totalorder %s18, 0
    %p61 = por %p59, %p60
    %s63 = sadd.s32 %s62, 1
    %p66 = scmp.eq.s32.totalorder %s12, 1
    %p67 = scmp.ne.s32.totalorder %s62, %s64
    %p68 = scmp.eq.s32.totalorder %s12, 0
    %p69 = por %p67, %p68
    %p70 = scmp.ne.s32.totalorder %s62, %s64
    %p71 = scmp.eq.s32.totalorder %s17, 1
    %p72 = por %p70, %p71
    %p73 = scmp.ne.s32.totalorder %s64, %s65
    %p74 = scmp.eq.s32.totalorder %s17, 0
    %p75 = por %p73, %p74
    %p76 = scmp.ne.s32.totalorder %s64, %s65
    %p77 = scmp.eq.s32.totalorder %s18, 1
    %p78 = por %p76, %p77
    %p80 = scmp.ne.s32.totalorder %s65, %s79
    %p81 = scmp.eq.s32.totalorder %s18, 0
    %p82 = por %p80, %p81
    %s84 = sadd.s32 %s83, 1
    %p87 = scmp.eq.s32.totalorder %s12, 1
    %p88 = scmp.ne.s32.totalorder %s83, %s85
    %p89 = scmp.eq.s32.totalorder %s12, 0
    %p90 = por %p88, %p89
    %p91 = scmp.ne.s32.totalorder %s83, %s85
    %p92 = scmp.eq.s32.totalorder %s17, 1
    %p93 = por %p91, %p92
    %p94 = scmp.ne.s32.totalorder %s85, %s86
    %p95 = scmp.eq.s32.totalorder %s17, 0
    %p96 = por %p94, %p95
    %p97 = scmp.ne.s32.totalorder %s85, %s86
    %p98 = scmp.eq.s32.totalorder %s18, 1
    %p99 = por %p97, %p98
    %p101 = scmp.ne.s32.totalorder %s86, %s100
    %p102 = scmp.eq.s32.totalorder %s18, 0
    %p103 = por %p101, %p102
    %s105 = sadd.s32 %s104, 1
    %p108 = scmp.eq.s32.totalorder %s12, 1
    %p109 = scmp.ne.s32.totalorder %s104, %s106
    %p110 = scmp.eq.s32.totalorder %s12, 0
    %p111 = por %p109, %p110
    %p112 = scmp.ne.s32.totalorder %s104, %s106
    %p113 = scmp.eq.s32.totalorder %s17, 1
    %p114 = por %p112, %p113
    %p115 = scmp.ne.s32.totalorder %s106, %s107
    %p116 = scmp.eq.s32.totalorder %s17, 0
    %p117 = por %p115, %p116
    %p118 = scmp.ne.s32.totalorder %s106, %s107
    %p119 = scmp.eq.s32.totalorder %s18, 1
    %p120 = por %p118, %p119
    %p122 = scmp.ne.s32.totalorder %s107, %s121
    %p123 = scmp.eq.s32.totalorder %s18, 0
    %p124 = por %p122, %p123
    %s126 = sadd.s32 %s125, 1
    %p129 = scmp.eq.s32.totalorder %s12, 1
    %p130 = scmp.ne.s32.totalorder %s125, %s127
    %p131 = scmp.eq.s32.totalorder %s12, 0
    %p132 = por %p130, %p131
    %p133 = scmp.ne.s32.totalorder %s125, %s127
    %p134 = scmp.eq.s32.totalorder %s17, 1
    %p135 = por %p133, %p134
    %p136 = scmp.ne.s32.totalorder %s127, %s128
    %p137 = scmp.eq.s32.totalorder %s17, 0
    %p138 = por %p136, %p137
    %p139 = scmp.ne.s32.totalorder %s127, %s128
    %p140 = scmp.eq.s32.totalorder %s18, 1
    %p141 = por %p139, %p140
    %p143 = scmp.ne.s32.totalorder %s128, %s142
    %p144 = scmp.eq.s32.totalorder %s18, 0
    %p145 = por %p143, %p144
    %s147 = sadd.s32 %s146, 1
    %p150 = scmp.eq.s32.totalorder %s12, 1
    %p151 = scmp.ne.s32.totalorder %s146, %s148
    %p152 = scmp.eq.s32.totalorder %s12, 0
    %p153 = por %p151, %p152
    %p154 = scmp.ne.s32.totalorder %s146, %s148
    %p155 = scmp.eq.s32.totalorder %s17, 1
    %p156 = por %p154, %p155
    %p157 = scmp.ne.s32.totalorder %s148, %s149
    %p158 = scmp.eq.s32.totalorder %s17, 0
    %p159 = por %p157, %p158
    %p160 = scmp.ne.s32.totalorder %s148, %s149
    %p161 = scmp.eq.s32.totalorder %s18, 1
    %p162 = por %p160, %p161
    %p164 = scmp.ne.s32.totalorder %s149, %s163
    %p165 = scmp.eq.s32.totalorder %s18, 0
    %p166 = por %p164, %p165
    %s167 = smul.u32 %s20, %s19
    %s168 = smul.u32 %s27, %s31
    %s169 = ssub.s32 %s167, %s168
    %p170 = scmp.eq.s32.totalorder %s169, 0
    %s172 = sadd.s32 %s171, 1
    %s173 = scalar_select %p170, %s171, %s172
    %p176 = pneg %p170
    %p177 = scmp.eq.s32.totalorder %s12, 1
    %p178 = por %p176, %p177
    %p179 = scmp.ne.s32.totalorder %s171, %s174
    %p180 = scmp.eq.s32.totalorder %s12, 0
    %p181 = por %p179, %p180
    %p182 = scmp.ne.s32.totalorder %s171, %s174
    %p183 = scmp.eq.s32.totalorder %s17, 1
    %p184 = por %p182, %p183
    %p185 = scmp.ne.s32.totalorder %s174, %s175
    %p186 = scmp.eq.s32.totalorder %s17, 0
    %p187 = por %p185, %p186
    %p188 = scmp.ne.s32.totalorder %s174, %s175
    %p189 = scmp.eq.s32.totalorder %s18, 1
    %p190 = por %p188, %p189
    %p192 = scmp.ne.s32.totalorder %s175, %s191
    %p193 = scmp.eq.s32.totalorder %s18, 0
    %p194 = por %p192, %p193
    %p195 = scmp.le.s32.totalorder 1, %s12
    %p196 = scmp.lt.s32.totalorder %s12, 3
    %p197 = pnand %p195, %p196
    %p198 = pneg %p197
    // Predicated region
    $region9: #{mlp_forward.1} parent=5 // pred_check
      _
    $region10: #{mlp_forward.1} parent=5 // pred_check_branch
      %200 = sbr.rel (%p197) target = $region12
    $region11: #{mlp_forward.1} parent=5 // pred_region
      %s201 = ssub.s32 %s12, 1
      // Predicated region
      $region13: #{mlp_forward.1} parent=11 // pred_check
        %p202 = pneg %p75
      $region14: #{mlp_forward.1} parent=11 // pred_check_branch
        %204 = sbr.rel (%p202) target = $region16
      $region15: #{mlp_forward.1} parent=11 // pred_region
        _
      $region16: #{mlp_forward.1} parent=11 // pred_fallthru
        _
      // Predicated region
      $region17: #{mlp_forward.1} parent=11 // pred_check
        %p205 = pneg %p96
      $region18: #{mlp_forward.1} parent=11 // pred_check_branch
        %207 = sbr.rel (%p205) target = $region20
      $region19: #{mlp_forward.1} parent=11 // pred_region
        _
      $region20: #{mlp_forward.1} parent=11 // pred_fallthru
        _
      // Predicated region
      $region21: #{mlp_forward.1} parent=11 // pred_check
        %p208 = pneg %p117
      $region22: #{mlp_forward.1} parent=11 // pred_check_branch
        %210 = sbr.rel (%p208) target = $region24
      $region23: #{mlp_forward.1} parent=11 // pred_region
        _
      $region24: #{mlp_forward.1} parent=11 // pred_fallthru
        _
      // Predicated region
      $region25: #{mlp_forward.1} parent=11 // pred_check
        %p211 = pneg %p138
      $region26: #{mlp_forward.1} parent=11 // pred_check_branch
        %213 = sbr.rel (%p211) target = $region28
      $region27: #{mlp_forward.1} parent=11 // pred_region
        _
      $region28: #{mlp_forward.1} parent=11 // pred_fallthru
        _
      // Predicated region
      $region29: #{mlp_forward.1} parent=11 // pred_check
        %p214 = pneg %p159
      $region30: #{mlp_forward.1} parent=11 // pred_check_branch
        %216 = sbr.rel (%p214) target = $region32
      $region31: #{mlp_forward.1} parent=11 // pred_region
        _
      $region32: #{mlp_forward.1} parent=11 // pred_fallthru
        _
    $region12: #{mlp_forward.1} parent=5 // pred_fallthru
      _
    %p217 = scmp.lt.s32.totalorder %s12, 2
    // Predicated region
    $region33: #{mlp_forward.1} parent=5 // pred_check
      %p218 = pneg %p217
    $region34: #{mlp_forward.1} parent=5 // pred_check_branch
      %220 = sbr.rel (%p218) target = $region36
    $region35: #{mlp_forward.1} parent=5 // pred_region
      // Predicated region
      $region37: #{mlp_forward.1} parent=35 // pred_check
        %p221 = pneg %p48
      $region38: #{mlp_forward.1} parent=35 // pred_check_branch
        %223 = sbr.rel (%p221) target = $region40
      $region39: #{mlp_forward.1} parent=35 // pred_region
        %s224 = ssub.s32 1, %s19
        %s225 = smul.u32 %s224, %s20
        %s226 = smul.u32 16, %s225
        %p227 = scmp.lt.s32.totalorder %s226, 15
        %s228 = scalar_select %p227, %s226, 15
        %s229 = smul.addr %s228, 8
        %s230 = scalar_lea.vmem %s0, %s229
        %s231 = ssub.s32 1, %s19
        %s232 = smul.u32 %s231, %s20
        %s233 = smul.u32 16, %s232
      $region40: #{mlp_forward.1} parent=35 // pred_fallthru
        _
    $region36: #{mlp_forward.1} parent=5 // pred_fallthru
      _
    %p234 = scmp.le.s32.totalorder 1, %s12
    %p235 = scmp.lt.s32.totalorder %s12, 3
    %p236 = pnand %p234, %p235
    %p237 = pneg %p236
    // Predicated region
    $region41: #{mlp_forward.1} parent=5 // pred_check
      _
    $region42: #{mlp_forward.1} parent=5 // pred_check_branch
      %239 = sbr.rel (%p236) target = $region44
    $region43: #{mlp_forward.1} parent=5 // pred_region
      %s240 = ssub.s32 %s12, 1
      %s241 = ssub.s32 1, %s21
      %s242 = smul.u32 %s241, %s22
      %s243 = smul.u32 16, %s242
      %p244 = scmp.lt.s32.totalorder %s243, 15
      %s245 = scalar_select %p244, %s243, 15
      %s246 = smul.addr %s245, 8
      %s247 = scalar_lea.vmem %s0, %s246
      %p248 = pneg %p54
      %p249 = pneg %p51
      %p250 = pneg %p75
      %p251 = pneg %p72
      %p252 = pneg %p96
      %p253 = pneg %p93
      %p254 = pneg %p117
      %p255 = pneg %p114
      %p256 = pneg %p138
      %p257 = pneg %p135
      %p258 = pneg %p159
      %p259 = pneg %p156
      %p260 = pneg %p187
      %p261 = pneg %p184
      %s262 = smul.u32 %s22, %s21
      %s263 = smul.u32 16, %s262
      %p264 = scmp.lt.s32.totalorder %s263, 15
      %s265 = scalar_select %p264, %s263, 15
      %s266 = smul.addr %s265, 8
      %s267 = scalar_lea.vmem %s6, %s266
      %s268 = ssub.s32 1, %s21
      %s269 = smul.u32 %s268, %s22
      %s270 = smul.u32 16, %s269
      %p271 = scmp.lt.s32.totalorder %s270, 15
      %s272 = scalar_select %p271, %s270, 15
      %s273 = smul.addr %s272, 8
      %s274 = scalar_lea.vmem %s0, %s273
      %s275 = ssub.s32 1, %s21
      %s276 = smul.u32 %s275, %s22
      %s277 = smul.u32 16, %s276
      %s278 = smul.u32 %s22, %s21
      %s279 = smul.u32 16, %s278
      %p280 = scmp.lt.s32.totalorder %s279, 15
      %s281 = scalar_select %p280, %s279, 15
      %s282 = smul.addr %s281, 8
      %s283 = scalar_lea.vmem %s6, %s282
      %s284 = smul.u32 %s22, %s21
      %s285 = smul.u32 16, %s284
      %s286 = smul.u32 %s22, 128
      %p287 = scmp.eq.s32.totalorder %s21, 0
      // Predicated region
      $region45: #{mlp_forward.1} parent=43 // pred_check
        %p288 = pneg %p287
      $region46: #{mlp_forward.1} parent=43 // pred_check_branch
        %290 = sbr.rel (%p288) target = $region48
      $region47: #{mlp_forward.1} parent=43 // pred_region
        %p291 = scmp.eq.s32.totalorder %s22, 0
        // Predicated region
        $region49: #{mlp_forward.1} parent=47 // pred_check
          %p292 = pneg %p291
        $region50: #{mlp_forward.1} parent=47 // pred_check_branch
          %294 = sbr.rel (%p292) target = $region52
        $region51: #{mlp_forward.1} parent=47 // pred_region
          %295 = vst [vmem:[#allocation3] sm:$0x1] 0.0
          %296 = vst [vmem:[#allocation4] sm:$0x1] 0.0
        $region52: #{mlp_forward.1} parent=47 // pred_fallthru
          _
        %v297 = vld [vmem:[%s274] sm:$0xff]
        %v298 = vld [vmem:[%s274 + $0x8] sm:$0xff]
        %v299 = vld [vmem:[%s274 + $0x10] sm:$0xff]
        %v300 = vld [vmem:[%s274 + $0x18] sm:$0xff]
        %v301 = vld [vmem:[%s274 + $0x20] sm:$0xff]
        %v302 = vld [vmem:[%s274 + $0x28] sm:$0xff]
        %v303 = vld [vmem:[%s274 + $0x30] sm:$0xff]
        %v304 = vld [vmem:[%s274 + $0x38] sm:$0xff]
        %v305 = vld [vmem:[%s274 + $0x40] sm:$0xff]
        %v306 = vld [vmem:[%s274 + $0x48] sm:$0xff]
        %v307 = vld [vmem:[%s274 + $0x50] sm:$0xff]
        %v308 = vld [vmem:[%s274 + $0x58] sm:$0xff]
        %v309 = vld [vmem:[%s274 + $0x60] sm:$0xff]
        %v310 = vld [vmem:[%s274 + $0x68] sm:$0xff]
        %v311 = vld [vmem:[%s274 + $0x70] sm:$0xff]
        %v312 = vld [vmem:[%s274 + $0x78] sm:$0xff]
        %v313 = vld [vmem:[%s1] sm:$0xff]
        %v314 = vld [vmem:[%s1 + $0x8] sm:$0xff]
        %v315 = vld [vmem:[%s1 + $0x10] sm:$0xff]
        %v316 = vld [vmem:[%s1 + $0x18] sm:$0xff]
        %v317 = vld [vmem:[%s1 + $0x20] sm:$0xff]
        %v318 = vld [vmem:[%s1 + $0x28] sm:$0xff]
        %v319 = vld [vmem:[%s1 + $0x30] sm:$0xff]
        %v320 = vld [vmem:[%s1 + $0x38] sm:$0xff]
        %v321 = vld [vmem:[%s1 + $0x40] sm:$0xff]
        %v322 = vld [vmem:[%s1 + $0x48] sm:$0xff]
        %v323 = vld [vmem:[%s1 + $0x50] sm:$0xff]
        %v324 = vld [vmem:[%s1 + $0x58] sm:$0xff]
        %v325 = vld [vmem:[%s1 + $0x60] sm:$0xff]
        %v326 = vld [vmem:[%s1 + $0x68] sm:$0xff]
        %v327 = vld [vmem:[%s1 + $0x70] sm:$0xff]
        %v328 = vld [vmem:[%s1 + $0x78] sm:$0xff]
        %v329 = vld [vmem:[%s2] sm:$0x1]
        %v331 = vlaneseq
        %v332 = vshrl.u32 %v331, 7
        %v333 = vsub.s32 0, %v332
        %v334 = vrot.slane %v329, %v333
        %336 = vmatprep.subr.mxu0 0.0
        %337 = vmatpush1.msra.mxu0 %v313
        %338 = vmatprep.subr.mxu0 0.0
        %339 = vmatpush1.msra.mxu0 %v314
        %340 = vmatprep.subr.mxu0 0.0
        %341 = vmatpush1.msra.mxu0 %v315
        %342 = vmatprep.subr.mxu0 0.0
        %343 = vmatpush1.msra.mxu0 %v316
        %344 = vmatprep.subr.mxu0 0.0
        %345 = vmatpush1.msra.mxu0 %v317
        %346 = vmatprep.subr.mxu0 0.0
        %347 = vmatpush1.msra.mxu0 %v318
        %348 = vmatprep.subr.mxu0 0.0
        %349 = vmatpush1.msra.mxu0 %v319
        %350 = vmatprep.subr.mxu0 0.0
        %351 = vmatpush1.msra.mxu0 %v320
        %352 = vmatprep.subr.mxu0 0.0
        %353 = vmatpush1.msra.mxu0 %v321
        %354 = vmatprep.subr.mxu0 0.0
        %355 = vmatpush1.msra.mxu0 %v322
        %356 = vmatprep.subr.mxu0 0.0
        %357 = vmatpush1.msra.mxu0 %v323
        %358 = vmatprep.subr.mxu0 0.0
        %359 = vmatpush1.msra.mxu0 %v324
        %360 = vmatprep.subr.mxu0 0.0
        %361 = vmatpush1.msra.mxu0 %v325
        %362 = vmatprep.subr.mxu0 0.0
        %363 = vmatpush1.msra.mxu0 %v326
        %364 = vmatprep.subr.mxu0 0.0
        %365 = vmatpush1.msra.mxu0 %v327
        %366 = vmatprep.subr.mxu0 0.0
        %367 = vmatpush1.msra.mxu0 %v328
        %368 = vmatprep.subr.mxu0 0.0
        %369 = vmatpush1.msra.mxu0 0.0
        %370 = vmatprep.subr.mxu0 0.0
        %371 = vmatpush1.msra.mxu0 0.0
        %372 = vmatprep.subr.mxu0 0.0
        %373 = vmatpush1.msra.mxu0 0.0
        %374 = vmatprep.subr.mxu0 0.0
        %375 = vmatpush1.msra.mxu0 0.0
        %376 = vmatprep.subr.mxu0 0.0
        %377 = vmatpush1.msra.mxu0 0.0
        %378 = vmatprep.subr.mxu0 0.0
        %379 = vmatpush1.msra.mxu0 0.0
        %380 = vmatprep.subr.mxu0 0.0
        %381 = vmatpush1.msra.mxu0 0.0
        %382 = vmatprep.subr.mxu0 0.0
        %383 = vmatpush1.msra.mxu0 0.0
        %384 = vmatprep.subr.mxu0 0.0
        %385 = vmatpush1.msra.mxu0 0.0
        %386 = vmatprep.subr.mxu0 0.0
        %387 = vmatpush1.msra.mxu0 0.0
        %388 = vmatprep.subr.mxu0 0.0
        %389 = vmatpush1.msra.mxu0 0.0
        %390 = vmatprep.subr.mxu0 0.0
        %391 = vmatpush1.msra.mxu0 0.0
        %392 = vmatprep.subr.mxu0 0.0
        %393 = vmatpush1.msra.mxu0 0.0
        %394 = vmatprep.subr.mxu0 0.0
        %395 = vmatpush1.msra.mxu0 0.0
        %396 = vmatprep.subr.mxu0 0.0
        %397 = vmatpush1.msra.mxu0 0.0
        %398 = vmatprep.subr.mxu0 0.0
        %399 = vmatpush1.msra.mxu0 0.0
        %400 = vmatprep.mubr.f32.mxu0 0.0
        %401 = vmatmul.mubr.f32.gmra.mrb[0].mxu0 %v297
        %v402 = vpop.f32.mrb[0].mxu0
        %v403 = vadd.f32 %v334, %v402
        %v404 = vpop.f32.mrb[0].mxu0
        %405 = vmatprep.mubr.f32.mxu0 0.0
        %406 = vmatmul.mubr.f32.gmra.mrb[0].mxu0 %v298
        %v407 = vpop.f32.mrb[0].mxu0
        %v408 = vadd.f32 %v334, %v407
        %v409 = vpop.f32.mrb[0].mxu0
        %410 = vmatprep.mubr.f32.mxu0 0.0
        %411 = vmatmul.mubr.f32.gmra.mrb[0].mxu0 %v299
        %v412 = vpop.f32.mrb[0].mxu0
        %v413 = vadd.f32 %v334, %v412
        %v414 = vpop.f32.mrb[0].mxu0
        %415 = vmatprep.mubr.f32.mxu0 0.0
        %416 = vmatmul.mubr.f32.gmra.mrb[0].mxu0 %v300
        %v417 = vpop.f32.mrb[0].mxu0
        %v418 = vadd.f32 %v334, %v417
        %v419 = vpop.f32.mrb[0].mxu0
        %420 = vmatprep.mubr.f32.mxu0 0.0
        %421 = vmatmul.mubr.f32.gmra.mrb[0].mxu0 %v301
        %v422 = vpop.f32.mrb[0].mxu0
        %v423 = vadd.f32 %v334, %v422
        %v424 = vpop.f32.mrb[0].mxu0
        %425 = vmatprep.mubr.f32.mxu0 0.0
        %426 = vmatmul.mubr.f32.gmra.mrb[0].mxu0 %v302
        %v427 = vpop.f32.mrb[0].mxu0
        %v428 = vadd.f32 %v334, %v427
        %v429 = vpop.f32.mrb[0].mxu0
        %430 = vmatprep.mubr.f32.mxu0 0.0
        %431 = vmatmul.mubr.f32.gmra.mrb[0].mxu0 %v303
        %v432 = vpop.f32.mrb[0].mxu0
        %v433 = vadd.f32 %v334, %v432
        %v434 = vpop.f32.mrb[0].mxu0
        %435 = vmatprep.mubr.f32.mxu0 0.0
        %436 = vmatmul.mubr.f32.gmra.mrb[0].mxu0 %v304
        %v437 = vpop.f32.mrb[0].mxu0
        %v438 = vadd.f32 %v334, %v437
        %v439 = vpop.f32.mrb[0].mxu0
        %440 = vmatprep.mubr.f32.mxu0 0.0
        %441 = vmatmul.mubr.f32.gmra.mrb[0].mxu0 %v305
        %v442 = vpop.f32.mrb[0].mxu0
        %v443 = vadd.f32 %v334, %v442
        %v444 = vpop.f32.mrb[0].mxu0
        %445 = vmatprep.mubr.f32.mxu0 0.0
        %446 = vmatmul.mubr.f32.gmra.mrb[0].mxu0 %v306
        %v447 = vpop.f32.mrb[0].mxu0
        %v448 = vadd.f32 %v334, %v447
        %v449 = vpop.f32.mrb[0].mxu0
        %450 = vmatprep.mubr.f32.mxu0 0.0
        %451 = vmatmul.mubr.f32.gmra.mrb[0].mxu0 %v307
        %v452 = vpop.f32.mrb[0].mxu0
        %v453 = vadd.f32 %v334, %v452
        %v454 = vpop.f32.mrb[0].mxu0
        %455 = vmatprep.mubr.f32.mxu0 0.0
        %456 = vmatmul.mubr.f32.gmra.mrb[0].mxu0 %v308
        %v457 = vpop.f32.mrb[0].mxu0
        %v458 = vadd.f32 %v334, %v457
        %v459 = vpop.f32.mrb[0].mxu0
        %460 = vmatprep.mubr.f32.mxu0 0.0
        %461 = vmatmul.mubr.f32.gmra.mrb[0].mxu0 %v309
        %v462 = vpop.f32.mrb[0].mxu0
        %v463 = vadd.f32 %v334, %v462
        %v464 = vpop.f32.mrb[0].mxu0
        %465 = vmatprep.mubr.f32.mxu0 0.0
        %466 = vmatmul.mubr.f32.gmra.mrb[0].mxu0 %v310
        %v467 = vpop.f32.mrb[0].mxu0
        %v468 = vadd.f32 %v334, %v467
        %v469 = vpop.f32.mrb[0].mxu0
        %470 = vmatprep.mubr.f32.mxu0 0.0
        %471 = vmatmul.mubr.f32.gmra.mrb[0].mxu0 %v311
        %v472 = vpop.f32.mrb[0].mxu0
        %v473 = vadd.f32 %v334, %v472
        %v474 = vpop.f32.mrb[0].mxu0
        %475 = vmatprep.mubr.f32.mxu0 0.0
        %476 = vmatmul.mubr.f32.gmra.mrb[0].mxu0 %v312
        %v477 = vpop.f32.mrb[0].mxu0
        %v478 = vadd.f32 %v334, %v477
        %v479 = vpop.f32.mrb[0].mxu0
        %480 = vdwg.mxu0
        %v481 = vmul.f32 %v403, 0.5
        %v482 = vmul.f32 %v408, 0.5
        %v483 = vmul.f32 %v413, 0.5
        %v484 = vmul.f32 %v418, 0.5
        %v485 = vmul.f32 %v423, 0.5
        %v486 = vmul.f32 %v428, 0.5
        %v487 = vmul.f32 %v433, 0.5
        %v488 = vmul.f32 %v438, 0.5
        %v489 = vmul.f32 %v443, 0.5
        %v490 = vmul.f32 %v448, 0.5
        %v491 = vmul.f32 %v453, 0.5
        %v492 = vmul.f32 %v458, 0.5
        %v493 = vmul.f32 %v463, 0.5
        %v494 = vmul.f32 %v468, 0.5
        %v495 = vmul.f32 %v473, 0.5
        %v496 = vmul.f32 %v478, 0.5
        %v497 = vmul.f32 %v403, 0.70710677
        %v498 = vmul.f32 %v408, 0.70710677
        %v499 = vmul.f32 %v413, 0.70710677
        %v500 = vmul.f32 %v418, 0.70710677
        %v501 = vmul.f32 %v423, 0.70710677
        %v502 = vmul.f32 %v428, 0.70710677
        %v503 = vmul.f32 %v433, 0.70710677
        %v504 = vmul.f32 %v438, 0.70710677
        %v505 = vmul.f32 %v443, 0.70710677
        %v506 = vmul.f32 %v448, 0.70710677
        %v507 = vmul.f32 %v453, 0.70710677
        %v508 = vmul.f32 %v458, 0.70710677
        %v509 = vmul.f32 %v463, 0.70710677
        %v510 = vmul.f32 %v468, 0.70710677
        %v511 = vmul.f32 %v473, 0.70710677
        %v512 = vmul.f32 %v478, 0.70710677
        %v513 = verf.f32.pop %v497
        %v514 = verf.f32.pop %v498
        %v515 = verf.f32.pop %v499
        %v516 = verf.f32.pop %v500
        %v517 = verf.f32.pop %v501
        %v518 = verf.f32.pop %v502
        %v519 = verf.f32.pop %v503
        %v520 = verf.f32.pop %v504
        %v521 = verf.f32.pop %v505
        %v522 = verf.f32.pop %v506
        %v523 = verf.f32.pop %v507
        %v524 = verf.f32.pop %v508
        %v525 = verf.f32.pop %v509
        %v526 = verf.f32.pop %v510
        %v527 = verf.f32.pop %v511
        %v528 = verf.f32.pop %v512
        %v529 = vadd.f32 %v513, 1.0
        %v530 = vadd.f32 %v514, 1.0
        %v531 = vadd.f32 %v515, 1.0
        %v532 = vadd.f32 %v516, 1.0
        %v533 = vadd.f32 %v517, 1.0
        %v534 = vadd.f32 %v518, 1.0
        %v535 = vadd.f32 %v519, 1.0
        %v536 = vadd.f32 %v520, 1.0
        %v537 = vadd.f32 %v521, 1.0
        %v538 = vadd.f32 %v522, 1.0
        %v539 = vadd.f32 %v523, 1.0
        %v540 = vadd.f32 %v524, 1.0
        %v541 = vadd.f32 %v525, 1.0
        %v542 = vadd.f32 %v526, 1.0
        %v543 = vadd.f32 %v527, 1.0
        %v544 = vadd.f32 %v528, 1.0
        %v545 = vmul.f32 %v481, %v529
        %v546 = vmul.f32 %v482, %v530
        %v547 = vmul.f32 %v483, %v531
        %v548 = vmul.f32 %v484, %v532
        %v549 = vmul.f32 %v485, %v533
        %v550 = vmul.f32 %v486, %v534
        %v551 = vmul.f32 %v487, %v535
        %v552 = vmul.f32 %v488, %v536
        %v553 = vmul.f32 %v489, %v537
        %v554 = vmul.f32 %v490, %v538
        %v555 = vmul.f32 %v491, %v539
        %v556 = vmul.f32 %v492, %v540
        %v557 = vmul.f32 %v493, %v541
        %v558 = vmul.f32 %v494, %v542
        %v559 = vmul.f32 %v495, %v543
        %v560 = vmul.f32 %v496, %v544
        %v561 = vld [vmem:[%s3] sm:$0xff]
        %v562 = vld [vmem:[%s3 + $0x8] sm:$0xff]
        %v563 = vld [vmem:[%s3 + $0x10] sm:$0xff]
        %v564 = vld [vmem:[%s3 + $0x18] sm:$0xff]
        %v565 = vld [vmem:[%s3 + $0x20] sm:$0xff]
        %v566 = vld [vmem:[%s3 + $0x28] sm:$0xff]
        %v567 = vld [vmem:[%s3 + $0x30] sm:$0xff]
        %v568 = vld [vmem:[%s3 + $0x38] sm:$0xff]
        %v569 = vld [vmem:[%s3 + $0x40] sm:$0xff]
        %v570 = vld [vmem:[%s3 + $0x48] sm:$0xff]
        %v571 = vld [vmem:[%s3 + $0x50] sm:$0xff]
        %v572 = vld [vmem:[%s3 + $0x58] sm:$0xff]
        %v573 = vld [vmem:[%s3 + $0x60] sm:$0xff]
        %v574 = vld [vmem:[%s3 + $0x68] sm:$0xff]
        %v575 = vld [vmem:[%s3 + $0x70] sm:$0xff]
        %v576 = vld [vmem:[%s3 + $0x78] sm:$0xff]
        %577 = vmatprep.subr.mxu0 0.0
        %578 = vmatpush1.msra.mxu0 %v561
        %579 = vmatprep.subr.mxu0 0.0
        %580 = vmatpush1.msra.mxu0 %v562
        %581 = vmatprep.subr.mxu0 0.0
        %582 = vmatpush1.msra.mxu0 %v563
        %583 = vmatprep.subr.mxu0 0.0
        %584 = vmatpush1.msra.mxu0 %v564
        %585 = vmatprep.subr.mxu0 0.0
        %586 = vmatpush1.msra.mxu0 %v565
        %587 = vmatprep.subr.mxu0 0.0
        %588 = vmatpush1.msra.mxu0 %v566
        %589 = vmatprep.subr.mxu0 0.0
        %590 = vmatpush1.msra.mxu0 %v567
        %591 = vmatprep.subr.mxu0 0.0
        %592 = vmatpush1.msra.mxu0 %v568
        %593 = vmatprep.subr.mxu0 0.0
        %594 = vmatpush1.msra.mxu0 %v569
        %595 = vmatprep.subr.mxu0 0.0
        %596 = vmatpush1.msra.mxu0 %v570
        %597 = vmatprep.subr.mxu0 0.0
        %598 = vmatpush1.msra.mxu0 %v571
        %599 = vmatprep.subr.mxu0 0.0
        %600 = vmatpush1.msra.mxu0 %v572
        %601 = vmatprep.subr.mxu0 0.0
        %602 = vmatpush1.msra.mxu0 %v573
        %603 = vmatprep.subr.mxu0 0.0
        %604 = vmatpush1.msra.mxu0 %v574
        %605 = vmatprep.subr.mxu0 0.0
        %606 = vmatpush1.msra.mxu0 %v575
        %607 = vmatprep.subr.mxu0 0.0
        %608 = vmatpush1.msra.mxu0 %v576
        %609 = vmatprep.subr.mxu0 0.0
        %610 = vmatpush1.msra.mxu0 0.0
        %611 = vmatprep.subr.mxu0 0.0
        %612 = vmatpush1.msra.mxu0 0.0
        %613 = vmatprep.subr.mxu0 0.0
        %614 = vmatpush1.msra.mxu0 0.0
        %615 = vmatprep.subr.mxu0 0.0
        %616 = vmatpush1.msra.mxu0 0.0
        %617 = vmatprep.subr.mxu0 0.0
        %618 = vmatpush1.msra.mxu0 0.0
        %619 = vmatprep.subr.mxu0 0.0
        %620 = vmatpush1.msra.mxu0 0.0
        %621 = vmatprep.subr.mxu0 0.0
        %622 = vmatpush1.msra.mxu0 0.0
        %623 = vmatprep.subr.mxu0 0.0
        %624 = vmatpush1.msra.mxu0 0.0
        %625 = vmatprep.subr.mxu0 0.0
        %626 = vmatpush1.msra.mxu0 0.0
        %627 = vmatprep.subr.mxu0 0.0
        %628 = vmatpush1.msra.mxu0 0.0
        %629 = vmatprep.subr.mxu0 0.0
        %630 = vmatpush1.msra.mxu0 0.0
        %631 = vmatprep.subr.mxu0 0.0
        %632 = vmatpush1.msra.mxu0 0.0
        %633 = vmatprep.subr.mxu0 0.0
        %634 = vmatpush1.msra.mxu0 0.0
        %635 = vmatprep.subr.mxu0 0.0
        %636 = vmatpush1.msra.mxu0 0.0
        %637 = vmatprep.subr.mxu0 0.0
        %638 = vmatpush1.msra.mxu0 0.0
        %639 = vmatprep.subr.mxu0 0.0
        %640 = vmatpush1.msra.mxu0 0.0
        %641 = vmatprep.mubr.f32.mxu0 0.0
        %642 = vmatmul.mubr.f32.gmra.mrb[0].mxu0 %v545
        %v643 = vpop.f32.mrb[0].mxu0
        %v644 = vadd.f32 0.0, %v643
        %v645 = vpop.f32.mrb[0].mxu0
        %646 = vmatprep.mubr.f32.mxu0 0.0
        %647 = vmatmul.mubr.f32.gmra.mrb[0].mxu0 %v546
        %v648 = vpop.f32.mrb[0].mxu0
        %v649 = vadd.f32 0.0, %v648
        %v650 = vpop.f32.mrb[0].mxu0
        %651 = vmatprep.mubr.f32.mxu0 0.0
        %652 = vmatmul.mubr.f32.gmra.mrb[0].mxu0 %v547
        %v653 = vpop.f32.mrb[0].mxu0
        %v654 = vadd.f32 0.0, %v653
        %v655 = vpop.f32.mrb[0].mxu0
        %656 = vmatprep.mubr.f32.mxu0 0.0
        %657 = vmatmul.mubr.f32.gmra.mrb[0].mxu0 %v548
        %v658 = vpop.f32.mrb[0].mxu0
        %v659 = vadd.f32 0.0, %v658
        %v660 = vpop.f32.mrb[0].mxu0
        %661 = vmatprep.mubr.f32.mxu0 0.0
        %662 = vmatmul.mubr.f32.gmra.mrb[0].mxu0 %v549
        %v663 = vpop.f32.mrb[0].mxu0
        %v664 = vadd.f32 0.0, %v663
        %v665 = vpop.f32.mrb[0].mxu0
        %666 = vmatprep.mubr.f32.mxu0 0.0
        %667 = vmatmul.mubr.f32.gmra.mrb[0].mxu0 %v550
        %v668 = vpop.f32.mrb[0].mxu0
        %v669 = vadd.f32 0.0, %v668
        %v670 = vpop.f32.mrb[0].mxu0
        %671 = vmatprep.mubr.f32.mxu0 0.0
        %672 = vmatmul.mubr.f32.gmra.mrb[0].mxu0 %v551
        %v673 = vpop.f32.mrb[0].mxu0
        %v674 = vadd.f32 0.0, %v673
        %v675 = vpop.f32.mrb[0].mxu0
        %676 = vmatprep.mubr.f32.mxu0 0.0
        %677 = vmatmul.mubr.f32.gmra.mrb[0].mxu0 %v552
        %v678 = vpop.f32.mrb[0].mxu0
        %v679 = vadd.f32 0.0, %v678
        %v680 = vpop.f32.mrb[0].mxu0
        %681 = vmatprep.mubr.f32.mxu0 0.0
        %682 = vmatmul.mubr.f32.gmra.mrb[0].mxu0 %v553
        %v683 = vpop.f32.mrb[0].mxu0
        %v684 = vadd.f32 0.0, %v683
        %v685 = vpop.f32.mrb[0].mxu0
        %686 = vmatprep.mubr.f32.mxu0 0.0
        %687 = vmatmul.mubr.f32.gmra.mrb[0].mxu0 %v554
        %v688 = vpop.f32.mrb[0].mxu0
        %v689 = vadd.f32 0.0, %v688
        %v690 = vpop.f32.mrb[0].mxu0
        %691 = vmatprep.mubr.f32.mxu0 0.0
        %692 = vmatmul.mubr.f32.gmra.mrb[0].mxu0 %v555
        %v693 = vpop.f32.mrb[0].mxu0
        %v694 = vadd.f32 0.0, %v693
        %v695 = vpop.f32.mrb[0].mxu0
        %696 = vmatprep.mubr.f32.mxu0 0.0
        %697 = vmatmul.mubr.f32.gmra.mrb[0].mxu0 %v556
        %v698 = vpop.f32.mrb[0].mxu0
        %v699 = vadd.f32 0.0, %v698
        %v700 = vpop.f32.mrb[0].mxu0
        %701 = vmatprep.mubr.f32.mxu0 0.0
        %702 = vmatmul.mubr.f32.gmra.mrb[0].mxu0 %v557
        %v703 = vpop.f32.mrb[0].mxu0
        %v704 = vadd.f32 0.0, %v703
        %v705 = vpop.f32.mrb[0].mxu0
        %706 = vmatprep.mubr.f32.mxu0 0.0
        %707 = vmatmul.mubr.f32.gmra.mrb[0].mxu0 %v558
        %v708 = vpop.f32.mrb[0].mxu0
        %v709 = vadd.f32 0.0, %v708
        %v710 = vpop.f32.mrb[0].mxu0
        %711 = vmatprep.mubr.f32.mxu0 0.0
        %712 = vmatmul.mubr.f32.gmra.mrb[0].mxu0 %v559
        %v713 = vpop.f32.mrb[0].mxu0
        %v714 = vadd.f32 0.0, %v713
        %v715 = vpop.f32.mrb[0].mxu0
        %716 = vmatprep.mubr.f32.mxu0 0.0
        %717 = vmatmul.mubr.f32.gmra.mrb[0].mxu0 %v560
        %v718 = vpop.f32.mrb[0].mxu0
        %v719 = vadd.f32 0.0, %v718
        %v720 = vpop.f32.mrb[0].mxu0
        %721 = vdwg.mxu0
        %s722 = scalar_lea.vmem [#allocation2], %s286
        %723 = vst [vmem:[%s722] sm:$0xff] %v644
        %724 = vst [vmem:[%s722 + $0x8] sm:$0xff] %v649
        %725 = vst [vmem:[%s722 + $0x10] sm:$0xff] %v654
        %726 = vst [vmem:[%s722 + $0x18] sm:$0xff] %v659
        %727 = vst [vmem:[%s722 + $0x20] sm:$0xff] %v664
        %728 = vst [vmem:[%s722 + $0x28] sm:$0xff] %v669
        %729 = vst [vmem:[%s722 + $0x30] sm:$0xff] %v674
        %730 = vst [vmem:[%s722 + $0x38] sm:$0xff] %v679
        %731 = vst [vmem:[%s722 + $0x40] sm:$0xff] %v684
        %732 = vst [vmem:[%s722 + $0x48] sm:$0xff] %v689
        %733 = vst [vmem:[%s722 + $0x50] sm:$0xff] %v694
        %734 = vst [vmem:[%s722 + $0x58] sm:$0xff] %v699
        %735 = vst [vmem:[%s722 + $0x60] sm:$0xff] %v704
        %736 = vst [vmem:[%s722 + $0x68] sm:$0xff] %v709
        %737 = vst [vmem:[%s722 + $0x70] sm:$0xff] %v714
        %738 = vst [vmem:[%s722 + $0x78] sm:$0xff] %v719
        %v739 = vld [vmem:[#allocation3] sm:$0x1]
        %v740 = vadd.f32 %v644, %v649
        %v741 = vadd.f32 %v740, %v654
        %v742 = vadd.f32 %v741, %v659
        %v743 = vadd.f32 %v742, %v664
        %v744 = vadd.f32 %v743, %v669
        %v745 = vadd.f32 %v744, %v674
        %v746 = vadd.f32 %v745, %v679
        %v747 = vadd.f32 %v746, %v684
        %v748 = vadd.f32 %v747, %v689
        %v749 = vadd.f32 %v748, %v694
        %v750 = vadd.f32 %v749, %v699
        %v751 = vadd.f32 %v750, %v704
        %v752 = vadd.f32 %v751, %v709
        %v753 = vadd.f32 %v752, %v714
        %v754 = vadd.f32 %v753, %v719
        %v755 = vrot.slane %v754, 4
        %v756 = vadd.f32 %v754, %v755
        %v757 = vrot.slane %v756, 2
        %v758 = vadd.f32 %v756, %v757
        %v759 = vrot.slane %v758, 1
        %v760 = vadd.f32 %v758, %v759
        %v761 = vadd.f32 %v739, %v760
        %762 = vst [vmem:[#allocation3] sm:$0x1] %v761
        %v763 = vld [vmem:[#allocation4] sm:$0x1]
        %v764 = vmul.f32 %v644, %v644
        %v765 = vmul.f32 %v649, %v649
        %v766 = vmul.f32 %v654, %v654
        %v767 = vmul.f32 %v659, %v659
        %v768 = vmul.f32 %v664, %v664
        %v769 = vmul.f32 %v669, %v669
        %v770 = vmul.f32 %v674, %v674
        %v771 = vmul.f32 %v679, %v679
        %v772 = vmul.f32 %v684, %v684
        %v773 = vmul.f32 %v689, %v689
        %v774 = vmul.f32 %v694, %v694
        %v775 = vmul.f32 %v699, %v699
        %v776 = vmul.f32 %v704, %v704
        %v777 = vmul.f32 %v709, %v709
        %v778 = vmul.f32 %v714, %v714
        %v779 = vmul.f32 %v719, %v719
        %v780 = vadd.f32 %v764, %v765
        %v781 = vadd.f32 %v780, %v766
        %v782 = vadd.f32 %v781, %v767
        %v783 = vadd.f32 %v782, %v768
        %v784 = vadd.f32 %v783, %v769
        %v785 = vadd.f32 %v784, %v770
        %v786 = vadd.f32 %v785, %v771
        %v787 = vadd.f32 %v786, %v772
        %v788 = vadd.f32 %v787, %v773
        %v789 = vadd.f32 %v788, %v774
        %v790 = vadd.f32 %v789, %v775
        %v791 = vadd.f32 %v790, %v776
        %v792 = vadd.f32 %v791, %v777
        %v793 = vadd.f32 %v792, %v778
        %v794 = vadd.f32 %v793, %v779
        %v795 = vrot.slane %v794, 4
        %v796 = vadd.f32 %v794, %v795
        %v797 = vrot.slane %v796, 2
        %v798 = vadd.f32 %v796, %v797
        %v799 = vrot.slane %v798, 1
        %v800 = vadd.f32 %v798, %v799
        %v801 = vadd.f32 %v763, %v800
        %802 = vst [vmem:[#allocation4] sm:$0x1] %v801
        // Predicated region
        $region53: #{mlp_forward.1} parent=47 // pred_check
          %p803 = pneg %p291
        $region54: #{mlp_forward.1} parent=47 // pred_check_branch
          %805 = sbr.rel (%p803) target = $region56
        $region55: #{mlp_forward.1} parent=47 // pred_region
          %v806 = vld [vmem:[#allocation3] sm:$0x1]
          %v807 = vmul.f32 %v806, 0.0078125
          %v808 = vld [vmem:[#allocation4] sm:$0x1]
          %v809 = vmul.f32 %v808, 0.0078125
          %v810 = vmul.f32 %v807, %v807
          %v811 = vsub.f32 %v809, %v810
          %v812 = vmax.f32 %v811, 0.0
          %v813 = vld [vmem:[%s4] sm:$0x1]
          %v814 = vadd.f32 %v812, 1e-05
          %v815 = vrsqrt.pop %v814
          %v816 = vmul.f32 %v813, %v815
          %817 = vst [vmem:[#allocation5] sm:$0x1] %v816
          %v818 = vld [vmem:[%s5] sm:$0x1]
          %v819 = vmul.f32 %v807, %v816
          %v820 = vsub.f32 %v818, %v819
          %821 = vst [vmem:[#allocation5 + $0x1] sm:$0x1] %v820
        $region56: #{mlp_forward.1} parent=47 // pred_fallthru
          _
      $region48: #{mlp_forward.1} parent=43 // pred_fallthru
        _
      %p822 = scmp.eq.s32.totalorder %s21, 1
      // Predicated region
      $region57: #{mlp_forward.1} parent=43 // pred_check
        %p823 = pneg %p822
      $region58: #{mlp_forward.1} parent=43 // pred_check_branch
        %825 = sbr.rel (%p823) target = $region60
      $region59: #{mlp_forward.1} parent=43 // pred_region
        %s826 = scalar_lea.vmem [#allocation2], %s286
        %v827 = vld [vmem:[%s826] sm:$0xff]
        %v828 = vld [vmem:[%s826 + $0x8] sm:$0xff]
        %v829 = vld [vmem:[%s826 + $0x10] sm:$0xff]
        %v830 = vld [vmem:[%s826 + $0x18] sm:$0xff]
        %v831 = vld [vmem:[%s826 + $0x20] sm:$0xff]
        %v832 = vld [vmem:[%s826 + $0x28] sm:$0xff]
        %v833 = vld [vmem:[%s826 + $0x30] sm:$0xff]
        %v834 = vld [vmem:[%s826 + $0x38] sm:$0xff]
        %v835 = vld [vmem:[%s826 + $0x40] sm:$0xff]
        %v836 = vld [vmem:[%s826 + $0x48] sm:$0xff]
        %v837 = vld [vmem:[%s826 + $0x50] sm:$0xff]
        %v838 = vld [vmem:[%s826 + $0x58] sm:$0xff]
        %v839 = vld [vmem:[%s826 + $0x60] sm:$0xff]
        %v840 = vld [vmem:[%s826 + $0x68] sm:$0xff]
        %v841 = vld [vmem:[%s826 + $0x70] sm:$0xff]
        %v842 = vld [vmem:[%s826 + $0x78] sm:$0xff]
        %v843 = vld [vmem:[#allocation5] sm:$0x1]
        %v844 = vlaneseq
        %v845 = vshrl.u32 %v844, 7
        %v846 = vsub.s32 0, %v845
        %v847 = vrot.slane %v843, %v846
        %v848 = vmul.f32 %v827, %v847
        %v849 = vmul.f32 %v828, %v847
        %v850 = vmul.f32 %v829, %v847
        %v851 = vmul.f32 %v830, %v847
        %v852 = vmul.f32 %v831, %v847
        %v853 = vmul.f32 %v832, %v847
        %v854 = vmul.f32 %v833, %v847
        %v855 = vmul.f32 %v834, %v847
        %v856 = vmul.f32 %v835, %v847
        %v857 = vmul.f32 %v836, %v847
        %v858 = vmul.f32 %v837, %v847
        %v859 = vmul.f32 %v838, %v847
        %v860 = vmul.f32 %v839, %v847
        %v861 = vmul.f32 %v840, %v847
        %v862 = vmul.f32 %v841, %v847
        %v863 = vmul.f32 %v842, %v847
        %v864 = vld [vmem:[#allocation5 + $0x1] sm:$0x1]
        %v865 = vlaneseq
        %v866 = vshrl.u32 %v865, 7
        %v867 = vsub.s32 0, %v866
        %v868 = vrot.slane %v864, %v867
        %v869 = vadd.f32 %v848, %v868
        %v870 = vadd.f32 %v849, %v868
        %v871 = vadd.f32 %v850, %v868
        %v872 = vadd.f32 %v851, %v868
        %v873 = vadd.f32 %v852, %v868
        %v874 = vadd.f32 %v853, %v868
        %v875 = vadd.f32 %v854, %v868
        %v876 = vadd.f32 %v855, %v868
        %v877 = vadd.f32 %v856, %v868
        %v878 = vadd.f32 %v857, %v868
        %v879 = vadd.f32 %v858, %v868
        %v880 = vadd.f32 %v859, %v868
        %v881 = vadd.f32 %v860, %v868
        %v882 = vadd.f32 %v861, %v868
        %v883 = vadd.f32 %v862, %v868
        %v884 = vadd.f32 %v863, %v868
        %885 = vst [vmem:[%s283] sm:$0xff] %v869
        %886 = vst [vmem:[%s283 + $0x8] sm:$0xff] %v870
        %887 = vst [vmem:[%s283 + $0x10] sm:$0xff] %v871
        %888 = vst [vmem:[%s283 + $0x18] sm:$0xff] %v872
        %889 = vst [vmem:[%s283 + $0x20] sm:$0xff] %v873
        %890 = vst [vmem:[%s283 + $0x28] sm:$0xff] %v874
        %891 = vst [vmem:[%s283 + $0x30] sm:$0xff] %v875
        %892 = vst [vmem:[%s283 + $0x38] sm:$0xff] %v876
        %893 = vst [vmem:[%s283 + $0x40] sm:$0xff] %v877
        %894 = vst [vmem:[%s283 + $0x48] sm:$0xff] %v878
        %895 = vst [vmem:[%s283 + $0x50] sm:$0xff] %v879
        %896 = vst [vmem:[%s283 + $0x58] sm:$0xff] %v880
        %897 = vst [vmem:[%s283 + $0x60] sm:$0xff] %v881
        %898 = vst [vmem:[%s283 + $0x68] sm:$0xff] %v882
        %899 = vst [vmem:[%s283 + $0x70] sm:$0xff] %v883
        %900 = vst [vmem:[%s283 + $0x78] sm:$0xff] %v884
      $region60: #{mlp_forward.1} parent=43 // pred_fallthru
        _
      %s901 = smul.u32 %s22, %s21
      %s902 = smul.u32 16, %s901
      %p903 = scmp.lt.s32.totalorder %s902, 15
      %s904 = scalar_select %p903, %s902, 15
      %s905 = smul.addr %s904, 8
      %s906 = scalar_lea.vmem %s6, %s905
      // Predicated region
      $region61: #{mlp_forward.1} parent=43 // pred_check
        %p907 = pneg %p184
      $region62: #{mlp_forward.1} parent=43 // pred_check_branch
        %909 = sbr.rel (%p907) target = $region64
      $region63: #{mlp_forward.1} parent=43 // pred_region
        %s910 = smul.u32 %s22, %s21
        %s911 = smul.u32 16, %s910
      $region64: #{mlp_forward.1} parent=43 // pred_fallthru
        _
    $region44: #{mlp_forward.1} parent=5 // pred_fallthru
      _
    %p912 = scmp.le.s32.totalorder 2, %s12
    // Predicated region
    $region65: #{mlp_forward.1} parent=5 // pred_check
      %p913 = pneg %p912
    $region66: #{mlp_forward.1} parent=5 // pred_check_branch
      %915 = sbr.rel (%p913) target = $region68
    $region67: #{mlp_forward.1} parent=5 // pred_region
      %s916 = ssub.s32 %s12, 2
      // Predicated region
      $region69: #{mlp_forward.1} parent=67 // pred_check
        %p917 = pneg %p190
      $region70: #{mlp_forward.1} parent=67 // pred_check_branch
        %919 = sbr.rel (%p917) target = $region72
      $region71: #{mlp_forward.1} parent=67 // pred_region
        %s920 = smul.u32 %s24, %s23
        %s921 = smul.u32 16, %s920
        %p922 = scmp.lt.s32.totalorder %s921, 15
        %s923 = scalar_select %p922, %s921, 15
        %s924 = smul.addr %s923, 8
        %s925 = scalar_lea.vmem %s6, %s924
      $region72: #{mlp_forward.1} parent=67 // pred_fallthru
        _
    $region68: #{mlp_forward.1} parent=5 // pred_fallthru
      _
  $region6: #{mlp_forward.1} parent=0 // loop_footer
    %s16 = sadd.s32 1, %s12
  $region7: #{mlp_forward.1} parent=0 // loop_footer_branch
    %11 = sbr.rel target = $region3
  $region8: #{mlp_forward.1} parent=0 // loop_exit
    _

</llo_original>
